<compile_context>
chip_gen: v7x
topology: tpu7x:2x2x1
jax: 0.10.0
libtpu: 0.0.40
codegen_flags: <defaults>
</compile_context>

<pallas_src>
import functools

import jax
import jax.numpy as jnp
from jax.experimental import pallas as pl
from jax.experimental.pallas import tpu as pltpu


def _round_up(n, m):
    return ((n + m - 1) // m) * m


def blob_mlp_kernel(x_ref, w1_ref, w23_ref, b_ref, o_ref):
    """One batch tile: (TB,F)@(F,H) -> (TB,H)@(H,O) + (1,O)."""
    hi = jax.lax.Precision.HIGHEST
    t = jnp.dot(x_ref[...], w1_ref[...], precision=hi,
                preferred_element_type=jnp.float32)            # (TB, H)
    o_ref[...] = (
        jnp.dot(t, w23_ref[...], precision=hi,
                preferred_element_type=jnp.float32)            # (TB, O)
        + b_ref[...]
    ).astype(o_ref.dtype)


@functools.partial(jax.jit, static_argnames=("batch_tile",))
def blob_model_forward(x, params, *, batch_tile=1024):
    """Forward pass of BlobModel. params = (w1, b1, w2, b2, w3, b3).

    wi are stored (in, out) (PyTorch's (out, in) weight transposed), bi are
    (1, out); semantics match nn.Sequential(Linear, Linear, Linear).
    """
    w1, b1, w2, b2, w3, b3 = params

    hi = jax.lax.Precision.HIGHEST
    # Fold layers 2+3 only -> keeps the rank-H structure (no F x O densify).
    w23 = jnp.dot(w2, w3, precision=hi)                                 # (H, O)
    b_fused = (jnp.dot(b1, w23, precision=hi)
               + jnp.dot(b2, w3, precision=hi) + b3)                    # (1, O)

    B, F = x.shape
    H = w1.shape[1]
    O = w23.shape[1]

    # Batch tile: multiple of 8 (sublane), big enough to amortize per-step
    # overhead, but no bigger than ceil(B/2) (rounded to 8) so the grid has
    # >= 2 tiles when B allows -> v7x megacore can shard the batch axis.
    TB = min(batch_tile, _round_up(pl.cdiv(B, 2), 8))
    grid = (pl.cdiv(B, TB),)   # ragged last tile handled by Pallas clipping

    out = pl.pallas_call(
        blob_mlp_kernel,
        out_shape=jax.ShapeDtypeStruct((B, O), x.dtype),
        grid=grid,
        in_specs=[
            # x: streamed over the batch; lane dim = full F (no padding copy).
            pl.BlockSpec((TB, F), lambda i: (i, 0)),
            # Low-rank weights + bias: constant index_map -> VMEM-resident.
            pl.BlockSpec((F, H), lambda i: (0, 0)),
            pl.BlockSpec((H, O), lambda i: (0, 0)),
            pl.BlockSpec((1, O), lambda i: (0, 0)),
        ],
        # Output unpadded; lane-dense stores happen automatically once O is a
        # multiple of 128 — padding small O would cost an extra HBM slice copy.
        out_specs=pl.BlockSpec((TB, O), lambda i: (i, 0)),
        compiler_params=pltpu.CompilerParams(
            dimension_semantics=("parallel",),   # batch tiles across TCs (v7x)
            vmem_limit_bytes=32 * 1024 * 1024,   # safe on v5e/v6e/v7x
        ),
    )(x, w1, w23, b_fused)

    return out


def init_blob_model_params(key, input_features, output_features,
                           hidden_units=8, dtype=jnp.float32):
    """Deterministic init mimicking PyTorch's default U(-1/sqrt(fan_in), ...)."""
    def linear_init(k, fan_in, fan_out):
        kw, kb = jax.random.split(k)
        bound = 1.0 / jnp.sqrt(jnp.array(fan_in, dtype=jnp.float32))
        w = jax.random.uniform(kw, (fan_in, fan_out), dtype,
                               minval=-bound, maxval=bound)
        b = jax.random.uniform(kb, (1, fan_out), dtype,
                               minval=-bound, maxval=bound)
        return w, b

    k1, k2, k3 = jax.random.split(key, 3)
    w1, b1 = linear_init(k1, input_features, hidden_units)
    w2, b2 = linear_init(k2, hidden_units, hidden_units)
    w3, b3 = linear_init(k3, hidden_units, output_features)
    return (w1, b1, w2, b2, w3, b3)


if __name__ == "__main__":
    key = jax.random.PRNGKey(0)
    k_params, k_x = jax.random.split(key)

    batch = 8
    input_features = 4
    hidden_units = 8
    output_features = 4

    params = init_blob_model_params(k_params, input_features,
                                    output_features, hidden_units)
    x = jax.random.normal(k_x, (batch, input_features), jnp.float32)

    out = blob_model_forward(x, params)
    out = jax.block_until_ready(out)

    # Pure-JAX reference of the original (unfused) 3-layer forward pass.
    w1, b1, w2, b2, w3, b3 = params
    hi = jax.lax.Precision.HIGHEST
    h1 = jnp.dot(x, w1, precision=hi) + b1
    h2 = jnp.dot(h1, w2, precision=hi) + b2
    ref = jnp.dot(h2, w3, precision=hi) + b3

    assert out.shape == (batch, output_features)
    assert jnp.allclose(out, ref, atol=1e-5, rtol=1e-5)

    print("KERNEL_OK")
</pallas_src>

<mosaic_0001>
module attributes {stable_mosaic.version = 11 : i64} {
  func.func @blob_mlp_kernel(%arg0: i32, %arg1: memref<8x4xf32, #tpu.memory_space<vmem>>, %arg2: memref<4x8xf32, #tpu.memory_space<vmem>>, %arg3: memref<8x4xf32, #tpu.memory_space<vmem>>, %arg4: memref<1x4xf32, #tpu.memory_space<vmem>>, %arg5: memref<8x4xf32, #tpu.memory_space<vmem>>) attributes {dimension_semantics = [#tpu.dimension_semantics<parallel>], iteration_bounds = array<i64: 1>, scalar_prefetch = 0 : i64, scratch_operands = 0 : i64, tpu.core_type = #tpu.core_type<tc>, window_params = [{transform_indices = @transform_0, window_bounds = array<i64: 8, 4>}, {pipeline_mode = #tpu.pipeline_mode<synchronous>, transform_indices = @transform_1, window_bounds = array<i64: 4, 8>}, {pipeline_mode = #tpu.pipeline_mode<synchronous>, transform_indices = @transform_2, window_bounds = array<i64: 8, 4>}, {pipeline_mode = #tpu.pipeline_mode<synchronous>, transform_indices = @transform_3, window_bounds = array<i64: 1, 4>}, {transform_indices = @transform_4, window_bounds = array<i64: 8, 4>}]} {
    %c0 = arith.constant 0 : index
    %c0_0 = arith.constant 0 : index
    %0 = vector.load %arg1[%c0, %c0_0] : memref<8x4xf32, #tpu.memory_space<vmem>>, vector<8x4xf32>
    %c0_1 = arith.constant 0 : index
    %c0_2 = arith.constant 0 : index
    %1 = vector.load %arg2[%c0_1, %c0_2] : memref<4x8xf32, #tpu.memory_space<vmem>>, vector<4x8xf32>
    %cst = arith.constant dense<0.000000e+00> : vector<8x8xf32>
    %2 = tpu.matmul %0, %1, %cst {dimension_numbers = #tpu.dot_dimension_numbers<[1], [0], [0], [1], [0, 0, 1, 1], [], []>, precision = #tpu.contract_precision<fp32>} : vector<8x4xf32>, vector<4x8xf32>, vector<8x8xf32> -> vector<8x8xf32>
    %c0_3 = arith.constant 0 : index
    %c0_4 = arith.constant 0 : index
    %3 = vector.load %arg3[%c0_3, %c0_4] : memref<8x4xf32, #tpu.memory_space<vmem>>, vector<8x4xf32>
    %cst_5 = arith.constant dense<0.000000e+00> : vector<8x4xf32>
    %4 = tpu.matmul %2, %3, %cst_5 {dimension_numbers = #tpu.dot_dimension_numbers<[1], [0], [0], [1], [0, 0, 1, 1], [], []>, precision = #tpu.contract_precision<fp32>} : vector<8x8xf32>, vector<8x4xf32>, vector<8x4xf32> -> vector<8x4xf32>
    %c0_6 = arith.constant 0 : index
    %c0_7 = arith.constant 0 : index
    %5 = vector.load %arg4[%c0_6, %c0_7] : memref<1x4xf32, #tpu.memory_space<vmem>>, vector<1x4xf32>
    %6 = vector.broadcast %5 : vector<1x4xf32> to vector<8x4xf32>
    %7 = arith.addf %4, %6 : vector<8x4xf32>
    %c0_8 = arith.constant 0 : index
    %c0_9 = arith.constant 0 : index
    %8 = vector.load %arg5[%c0_8, %c0_9] : memref<8x4xf32, #tpu.memory_space<vmem>>, vector<8x4xf32>
    tpu.vector_store %arg5[%c0_8, %c0_9], %7 {strides = array<i32>} : memref<8x4xf32, #tpu.memory_space<vmem>>, vector<8x4xf32>,
    return
  }
  func.func @transform_0(%arg0: i32) -> (i32, i32) {
    %c0_i32 = arith.constant 0 : i32
    %c0_i32_0 = arith.constant 0 : i32
    return %arg0, %c0_i32 : i32, i32
  }
  func.func @transform_1(%arg0: i32) -> (i32, i32) {
    %c0_i32 = arith.constant 0 : i32
    %c0_i32_0 = arith.constant 0 : i32
    %c0_i32_1 = arith.constant 0 : i32
    return %c0_i32, %c0_i32_0 : i32, i32
  }
  func.func @transform_2(%arg0: i32) -> (i32, i32) {
    %c0_i32 = arith.constant 0 : i32
    %c0_i32_0 = arith.constant 0 : i32
    %c0_i32_1 = arith.constant 0 : i32
    return %c0_i32, %c0_i32_0 : i32, i32
  }
  func.func @transform_3(%arg0: i32) -> (i32, i32) {
    %c0_i32 = arith.constant 0 : i32
    %c0_i32_0 = arith.constant 0 : i32
    %c0_i32_1 = arith.constant 0 : i32
    return %c0_i32, %c0_i32_0 : i32, i32
  }
  func.func @transform_4(%arg0: i32) -> (i32, i32) {
    %c0_i32 = arith.constant 0 : i32
    %c0_i32_0 = arith.constant 0 : i32
    return %arg0, %c0_i32 : i32, i32
  }
}

</mosaic_0001>

<llo_original>
// kernel: blob_model_forward.1
$region0: #{blob_model_forward.1}
  #allocation0 [shape = 'u32[]', space=smem, size = 0x4, offset = 0x4, fixed_abs, tag = 'smem constant byte address 0x4 - core index']
  #allocation1 [shape = 'u32[144,128]{1,0:T(1,128)}', space=vmem, size = 0x12000, scoped, tag = 'internal scratch']
  %s0 = inlined_call_operand.vmem [shape: f32[8,4], index: 0, kind: input, shape index: {}]
  %s1 = inlined_call_operand.vmem [shape: f32[4,8], index: 1, kind: input, shape index: {}]
  %s2 = inlined_call_operand.vmem [shape: f32[8,4], index: 2, kind: input, shape index: {}]
  %s3 = inlined_call_operand.vmem [shape: f32[1,4], index: 3, kind: input, shape index: {}]
  %s4 = inlined_call_operand.vmem [shape: f32[8,4], index: 4, kind: output, shape index: {}]
  %s5 = sld [smem:[#allocation0]]
  $region26: #{blob_model_forward.1} parent=0
    _
  %s7 = ssub.s32 1, %s5
  %s8 = scalar_select 0, %s7, %s5
  // Predicated region
  $region2: #{blob_model_forward.1} parent=0 // pred_check
    _
  $region3: #{blob_model_forward.1} parent=0 // pred_check_branch
    %10 = sbr.rel (0) target = $region5
  $region4: #{blob_model_forward.1} parent=0 // pred_region
    _
  $region5: #{blob_model_forward.1} parent=0 // pred_fallthru
    _
  // Predicated region
  $region6: #{blob_model_forward.1} parent=0 // pred_check
    _
  $region7: #{blob_model_forward.1} parent=0 // pred_check_branch
    %12 = sbr.rel (0) target = $region9
  $region8: #{blob_model_forward.1} parent=0 // pred_region
    _
  $region9: #{blob_model_forward.1} parent=0 // pred_fallthru
    _
  // Predicated region
  $region10: #{blob_model_forward.1} parent=0 // pred_check
    _
  $region11: #{blob_model_forward.1} parent=0 // pred_check_branch
    %14 = sbr.rel (0) target = $region13
  $region12: #{blob_model_forward.1} parent=0 // pred_region
    _
  $region13: #{blob_model_forward.1} parent=0 // pred_fallthru
    _
  // Predicated region
  $region14: #{blob_model_forward.1} parent=0 // pred_check
    _
  $region15: #{blob_model_forward.1} parent=0 // pred_check_branch
    %16 = sbr.rel (0) target = $region17
  $region16: #{blob_model_forward.1} parent=0 // pred_region
    _
  $region17: #{blob_model_forward.1} parent=0 // pred_fallthru
    _
  %v17 = vld [vmem:[%s0] sm:$0xff]
  %v18 = vld [vmem:[%s1] sm:$0xf]
  %vm19 = vcmask 31744
  %v21 = vsel %vm19, %v17, 0
  %vm23 = vcmask 1043456
  %v25 = vsel %vm23, %v18, 0
  %27 = vmatprep.subr.mxu0 0.0
  %v28 = vand.u32 %v25, 4294901760
  %29 = vmatpush1.msra.mxu0 %v28
  %30 = vmatprep.subr.mxu0 0.0
  %31 = vmatpush1.msra.mxu0 0.0
  %32 = vmatprep.subr.mxu0 0.0
  %33 = vmatpush1.msra.mxu0 0.0
  %34 = vmatprep.subr.mxu0 0.0
  %35 = vmatpush1.msra.mxu0 0.0
  %36 = vmatprep.subr.mxu0 0.0
  %37 = vmatpush1.msra.mxu0 0.0
  %38 = vmatprep.subr.mxu0 0.0
  %39 = vmatpush1.msra.mxu0 0.0
  %40 = vmatprep.subr.mxu0 0.0
  %41 = vmatpush1.msra.mxu0 0.0
  %42 = vmatprep.subr.mxu0 0.0
  %43 = vmatpush1.msra.mxu0 0.0
  %44 = vmatprep.subr.mxu0 0.0
  %45 = vmatpush1.msra.mxu0 0.0
  %46 = vmatprep.subr.mxu0 0.0
  %47 = vmatpush1.msra.mxu0 0.0
  %48 = vmatprep.subr.mxu0 0.0
  %49 = vmatpush1.msra.mxu0 0.0
  %50 = vmatprep.subr.mxu0 0.0
  %51 = vmatpush1.msra.mxu0 0.0
  %52 = vmatprep.subr.mxu0 0.0
  %53 = vmatpush1.msra.mxu0 0.0
  %54 = vmatprep.subr.mxu0 0.0
  %55 = vmatpush1.msra.mxu0 0.0
  %56 = vmatprep.subr.mxu0 0.0
  %57 = vmatpush1.msra.mxu0 0.0
  %58 = vmatprep.subr.mxu0 0.0
  %59 = vmatpush1.msra.mxu0 0.0
  %60 = vmatprep.subr.mxu0 0.0
  %61 = vmatpush1.msra.mxu0 0.0
  %62 = vmatprep.subr.mxu0 0.0
  %63 = vmatpush1.msra.mxu0 0.0
  %64 = vmatprep.subr.mxu0 0.0
  %65 = vmatpush1.msra.mxu0 0.0
  %66 = vmatprep.subr.mxu0 0.0
  %67 = vmatpush1.msra.mxu0 0.0
  %68 = vmatprep.subr.mxu0 0.0
  %69 = vmatpush1.msra.mxu0 0.0
  %70 = vmatprep.subr.mxu0 0.0
  %71 = vmatpush1.msra.mxu0 0.0
  %72 = vmatprep.subr.mxu0 0.0
  %73 = vmatpush1.msra.mxu0 0.0
  %74 = vmatprep.subr.mxu0 0.0
  %75 = vmatpush1.msra.mxu0 0.0
  %76 = vmatprep.subr.mxu0 0.0
  %77 = vmatpush1.msra.mxu0 0.0
  %78 = vmatprep.subr.mxu0 0.0
  %79 = vmatpush1.msra.mxu0 0.0
  %80 = vmatprep.subr.mxu0 0.0
  %81 = vmatpush1.msra.mxu0 0.0
  %82 = vmatprep.subr.mxu0 0.0
  %83 = vmatpush1.msra.mxu0 0.0
  %84 = vmatprep.subr.mxu0 0.0
  %85 = vmatpush1.msra.mxu0 0.0
  %86 = vmatprep.subr.mxu0 0.0
  %87 = vmatpush1.msra.mxu0 0.0
  %88 = vmatprep.subr.mxu0 0.0
  %89 = vmatpush1.msra.mxu0 0.0
  %90 = vmatprep.subr.mxu0 0.0
  %91 = vmatpush1.msra.mxu0 0.0
  %92 = vmatprep.mubr.f32.mxu0 0.0
  %v93 = vand.u32 %v21, 4294901760
  %v94 = vsub.f32 %v21, %v93
  %v95 = vand.u32 %v94, 4294901760
  %v96 = vsub.f32 %v94, %v95
  %v97 = vand.u32 %v96, 4294901760
  %98 = vmatmul.mubr.f32.gmra.mrb[0].mxu0 %v97
  %v99 = vpop.f32.mrb[0].mxu0
  %v100 = vadd.f32 0.0, %v99
  %v101 = vpop.f32.mrb[0].mxu0
  %102 = vdwg.mxu0
  %103 = vmatprep.subr.mxu0 0.0
  %v104 = vand.u32 %v25, 4294901760
  %v105 = vsub.f32 %v25, %v104
  %v106 = vand.u32 %v105, 4294901760
  %v107 = vsub.f32 %v105, %v106
  %v108 = vand.u32 %v107, 4294901760
  %109 = vmatpush1.msra.mxu0 %v108
  %110 = vmatprep.subr.mxu0 0.0
  %111 = vmatpush1.msra.mxu0 0.0
  %112 = vmatprep.subr.mxu0 0.0
  %113 = vmatpush1.msra.mxu0 0.0
  %114 = vmatprep.subr.mxu0 0.0
  %115 = vmatpush1.msra.mxu0 0.0
  %116 = vmatprep.subr.mxu0 0.0
  %117 = vmatpush1.msra.mxu0 0.0
  %118 = vmatprep.subr.mxu0 0.0
  %119 = vmatpush1.msra.mxu0 0.0
  %120 = vmatprep.subr.mxu0 0.0
  %121 = vmatpush1.msra.mxu0 0.0
  %122 = vmatprep.subr.mxu0 0.0
  %123 = vmatpush1.msra.mxu0 0.0
  %124 = vmatprep.subr.mxu0 0.0
  %125 = vmatpush1.msra.mxu0 0.0
  %126 = vmatprep.subr.mxu0 0.0
  %127 = vmatpush1.msra.mxu0 0.0
  %128 = vmatprep.subr.mxu0 0.0
  %129 = vmatpush1.msra.mxu0 0.0
  %130 = vmatprep.subr.mxu0 0.0
  %131 = vmatpush1.msra.mxu0 0.0
  %132 = vmatprep.subr.mxu0 0.0
  %133 = vmatpush1.msra.mxu0 0.0
  %134 = vmatprep.subr.mxu0 0.0
  %135 = vmatpush1.msra.mxu0 0.0
  %136 = vmatprep.subr.mxu0 0.0
  %137 = vmatpush1.msra.mxu0 0.0
  %138 = vmatprep.subr.mxu0 0.0
  %139 = vmatpush1.msra.mxu0 0.0
  %140 = vmatprep.subr.mxu0 0.0
  %141 = vmatpush1.msra.mxu0 0.0
  %142 = vmatprep.subr.mxu0 0.0
  %143 = vmatpush1.msra.mxu0 0.0
  %144 = vmatprep.subr.mxu0 0.0
  %145 = vmatpush1.msra.mxu0 0.0
  %146 = vmatprep.subr.mxu0 0.0
  %147 = vmatpush1.msra.mxu0 0.0
  %148 = vmatprep.subr.mxu0 0.0
  %149 = vmatpush1.msra.mxu0 0.0
  %150 = vmatprep.subr.mxu0 0.0
  %151 = vmatpush1.msra.mxu0 0.0
  %152 = vmatprep.subr.mxu0 0.0
  %153 = vmatpush1.msra.mxu0 0.0
  %154 = vmatprep.subr.mxu0 0.0
  %155 = vmatpush1.msra.mxu0 0.0
  %156 = vmatprep.subr.mxu0 0.0
  %157 = vmatpush1.msra.mxu0 0.0
  %158 = vmatprep.subr.mxu0 0.0
  %159 = vmatpush1.msra.mxu0 0.0
  %160 = vmatprep.subr.mxu0 0.0
  %161 = vmatpush1.msra.mxu0 0.0
  %162 = vmatprep.subr.mxu0 0.0
  %163 = vmatpush1.msra.mxu0 0.0
  %164 = vmatprep.subr.mxu0 0.0
  %165 = vmatpush1.msra.mxu0 0.0
  %166 = vmatprep.subr.mxu0 0.0
  %167 = vmatpush1.msra.mxu0 0.0
  %168 = vmatprep.subr.mxu0 0.0
  %169 = vmatpush1.msra.mxu0 0.0
  %170 = vmatprep.subr.mxu0 0.0
  %171 = vmatpush1.msra.mxu0 0.0
  %172 = vmatprep.mubr.f32.mxu0 0.0
  %v173 = vand.u32 %v21, 4294901760
  %174 = vmatmul.mubr.f32.gmra.mrb[0].mxu0 %v173
  %v175 = vpop.f32.mrb[0].mxu0
  %v176 = vadd.f32 %v100, %v175
  %v177 = vpop.f32.mrb[0].mxu0
  %178 = vdwg.mxu0
  %179 = vmatprep.subr.mxu0 0.0
  %v180 = vand.u32 %v25, 4294901760
  %v181 = vsub.f32 %v25, %v180
  %182 = vmatpush1.msra.mxu0 %v181
  %183 = vmatprep.subr.mxu0 0.0
  %184 = vmatpush1.msra.mxu0 0.0
  %185 = vmatprep.subr.mxu0 0.0
  %186 = vmatpush1.msra.mxu0 0.0
  %187 = vmatprep.subr.mxu0 0.0
  %188 = vmatpush1.msra.mxu0 0.0
  %189 = vmatprep.subr.mxu0 0.0
  %190 = vmatpush1.msra.mxu0 0.0
  %191 = vmatprep.subr.mxu0 0.0
  %192 = vmatpush1.msra.mxu0 0.0
  %193 = vmatprep.subr.mxu0 0.0
  %194 = vmatpush1.msra.mxu0 0.0
  %195 = vmatprep.subr.mxu0 0.0
  %196 = vmatpush1.msra.mxu0 0.0
  %197 = vmatprep.subr.mxu0 0.0
  %198 = vmatpush1.msra.mxu0 0.0
  %199 = vmatprep.subr.mxu0 0.0
  %200 = vmatpush1.msra.mxu0 0.0
  %201 = vmatprep.subr.mxu0 0.0
  %202 = vmatpush1.msra.mxu0 0.0
  %203 = vmatprep.subr.mxu0 0.0
  %204 = vmatpush1.msra.mxu0 0.0
  %205 = vmatprep.subr.mxu0 0.0
  %206 = vmatpush1.msra.mxu0 0.0
  %207 = vmatprep.subr.mxu0 0.0
  %208 = vmatpush1.msra.mxu0 0.0
  %209 = vmatprep.subr.mxu0 0.0
  %210 = vmatpush1.msra.mxu0 0.0
  %211 = vmatprep.subr.mxu0 0.0
  %212 = vmatpush1.msra.mxu0 0.0
  %213 = vmatprep.subr.mxu0 0.0
  %214 = vmatpush1.msra.mxu0 0.0
  %215 = vmatprep.subr.mxu0 0.0
  %216 = vmatpush1.msra.mxu0 0.0
  %217 = vmatprep.subr.mxu0 0.0
  %218 = vmatpush1.msra.mxu0 0.0
  %219 = vmatprep.subr.mxu0 0.0
  %220 = vmatpush1.msra.mxu0 0.0
  %221 = vmatprep.subr.mxu0 0.0
  %222 = vmatpush1.msra.mxu0 0.0
  %223 = vmatprep.subr.mxu0 0.0
  %224 = vmatpush1.msra.mxu0 0.0
  %225 = vmatprep.subr.mxu0 0.0
  %226 = vmatpush1.msra.mxu0 0.0
  %227 = vmatprep.subr.mxu0 0.0
  %228 = vmatpush1.msra.mxu0 0.0
  %229 = vmatprep.subr.mxu0 0.0
  %230 = vmatpush1.msra.mxu0 0.0
  %231 = vmatprep.subr.mxu0 0.0
  %232 = vmatpush1.msra.mxu0 0.0
  %233 = vmatprep.subr.mxu0 0.0
  %234 = vmatpush1.msra.mxu0 0.0
  %235 = vmatprep.subr.mxu0 0.0
  %236 = vmatpush1.msra.mxu0 0.0
  %237 = vmatprep.subr.mxu0 0.0
  %238 = vmatpush1.msra.mxu0 0.0
  %239 = vmatprep.subr.mxu0 0.0
  %240 = vmatpush1.msra.mxu0 0.0
  %241 = vmatprep.subr.mxu0 0.0
  %242 = vmatpush1.msra.mxu0 0.0
  %243 = vmatprep.subr.mxu0 0.0
  %244 = vmatpush1.msra.mxu0 0.0
  %245 = vmatprep.mubr.f32.mxu0 0.0
  %v246 = vand.u32 %v21, 4294901760
  %v247 = vsub.f32 %v21, %v246
  %248 = vmatmul.mubr.f32.gmra.mrb[0].mxu0 %v247
  %v249 = vpop.f32.mrb[0].mxu0
  %v250 = vadd.f32 %v176, %v249
  %v251 = vpop.f32.mrb[0].mxu0
  %252 = vdwg.mxu0
  %253 = vmatprep.subr.mxu0 0.0
  %v254 = vand.u32 %v25, 4294901760
  %255 = vmatpush1.msra.mxu0 %v254
  %256 = vmatprep.subr.mxu0 0.0
  %257 = vmatpush1.msra.mxu0 0.0
  %258 = vmatprep.subr.mxu0 0.0
  %259 = vmatpush1.msra.mxu0 0.0
  %260 = vmatprep.subr.mxu0 0.0
  %261 = vmatpush1.msra.mxu0 0.0
  %262 = vmatprep.subr.mxu0 0.0
  %263 = vmatpush1.msra.mxu0 0.0
  %264 = vmatprep.subr.mxu0 0.0
  %265 = vmatpush1.msra.mxu0 0.0
  %266 = vmatprep.subr.mxu0 0.0
  %267 = vmatpush1.msra.mxu0 0.0
  %268 = vmatprep.subr.mxu0 0.0
  %269 = vmatpush1.msra.mxu0 0.0
  %270 = vmatprep.subr.mxu0 0.0
  %271 = vmatpush1.msra.mxu0 0.0
  %272 = vmatprep.subr.mxu0 0.0
  %273 = vmatpush1.msra.mxu0 0.0
  %274 = vmatprep.subr.mxu0 0.0
  %275 = vmatpush1.msra.mxu0 0.0
  %276 = vmatprep.subr.mxu0 0.0
  %277 = vmatpush1.msra.mxu0 0.0
  %278 = vmatprep.subr.mxu0 0.0
  %279 = vmatpush1.msra.mxu0 0.0
  %280 = vmatprep.subr.mxu0 0.0
  %281 = vmatpush1.msra.mxu0 0.0
  %282 = vmatprep.subr.mxu0 0.0
  %283 = vmatpush1.msra.mxu0 0.0
  %284 = vmatprep.subr.mxu0 0.0
  %285 = vmatpush1.msra.mxu0 0.0
  %286 = vmatprep.subr.mxu0 0.0
  %287 = vmatpush1.msra.mxu0 0.0
  %288 = vmatprep.subr.mxu0 0.0
  %289 = vmatpush1.msra.mxu0 0.0
  %290 = vmatprep.subr.mxu0 0.0
  %291 = vmatpush1.msra.mxu0 0.0
  %292 = vmatprep.subr.mxu0 0.0
  %293 = vmatpush1.msra.mxu0 0.0
  %294 = vmatprep.subr.mxu0 0.0
  %295 = vmatpush1.msra.mxu0 0.0
  %296 = vmatprep.subr.mxu0 0.0
  %297 = vmatpush1.msra.mxu0 0.0
  %298 = vmatprep.subr.mxu0 0.0
  %299 = vmatpush1.msra.mxu0 0.0
  %300 = vmatprep.subr.mxu0 0.0
  %301 = vmatpush1.msra.mxu0 0.0
  %302 = vmatprep.subr.mxu0 0.0
  %303 = vmatpush1.msra.mxu0 0.0
  %304 = vmatprep.subr.mxu0 0.0
  %305 = vmatpush1.msra.mxu0 0.0
  %306 = vmatprep.subr.mxu0 0.0
  %307 = vmatpush1.msra.mxu0 0.0
  %308 = vmatprep.subr.mxu0 0.0
  %309 = vmatpush1.msra.mxu0 0.0
  %310 = vmatprep.subr.mxu0 0.0
  %311 = vmatpush1.msra.mxu0 0.0
  %312 = vmatprep.subr.mxu0 0.0
  %313 = vmatpush1.msra.mxu0 0.0
  %314 = vmatprep.subr.mxu0 0.0
  %315 = vmatpush1.msra.mxu0 0.0
  %316 = vmatprep.subr.mxu0 0.0
  %317 = vmatpush1.msra.mxu0 0.0
  %318 = vmatprep.mubr.f32.mxu0 0.0
  %v319 = vand.u32 %v21, 4294901760
  %v320 = vsub.f32 %v21, %v319
  %v321 = vand.u32 %v320, 4294901760
  %322 = vmatmul.mubr.f32.gmra.mrb[0].mxu0 %v321
  %v323 = vpop.f32.mrb[0].mxu0
  %v324 = vadd.f32 %v250, %v323
  %v325 = vpop.f32.mrb[0].mxu0
  %326 = vdwg.mxu0
  %327 = vmatprep.subr.mxu0 0.0
  %v328 = vand.u32 %v25, 4294901760
  %v329 = vsub.f32 %v25, %v328
  %v330 = vand.u32 %v329, 4294901760
  %331 = vmatpush1.msra.mxu0 %v330
  %332 = vmatprep.subr.mxu0 0.0
  %333 = vmatpush1.msra.mxu0 0.0
  %334 = vmatprep.subr.mxu0 0.0
  %335 = vmatpush1.msra.mxu0 0.0
  %336 = vmatprep.subr.mxu0 0.0
  %337 = vmatpush1.msra.mxu0 0.0
  %338 = vmatprep.subr.mxu0 0.0
  %339 = vmatpush1.msra.mxu0 0.0
  %340 = vmatprep.subr.mxu0 0.0
  %341 = vmatpush1.msra.mxu0 0.0
  %342 = vmatprep.subr.mxu0 0.0
  %343 = vmatpush1.msra.mxu0 0.0
  %344 = vmatprep.subr.mxu0 0.0
  %345 = vmatpush1.msra.mxu0 0.0
  %346 = vmatprep.subr.mxu0 0.0
  %347 = vmatpush1.msra.mxu0 0.0
  %348 = vmatprep.subr.mxu0 0.0
  %349 = vmatpush1.msra.mxu0 0.0
  %350 = vmatprep.subr.mxu0 0.0
  %351 = vmatpush1.msra.mxu0 0.0
  %352 = vmatprep.subr.mxu0 0.0
  %353 = vmatpush1.msra.mxu0 0.0
  %354 = vmatprep.subr.mxu0 0.0
  %355 = vmatpush1.msra.mxu0 0.0
  %356 = vmatprep.subr.mxu0 0.0
  %357 = vmatpush1.msra.mxu0 0.0
  %358 = vmatprep.subr.mxu0 0.0
  %359 = vmatpush1.msra.mxu0 0.0
  %360 = vmatprep.subr.mxu0 0.0
  %361 = vmatpush1.msra.mxu0 0.0
  %362 = vmatprep.subr.mxu0 0.0
  %363 = vmatpush1.msra.mxu0 0.0
  %364 = vmatprep.subr.mxu0 0.0
  %365 = vmatpush1.msra.mxu0 0.0
  %366 = vmatprep.subr.mxu0 0.0
  %367 = vmatpush1.msra.mxu0 0.0
  %368 = vmatprep.subr.mxu0 0.0
  %369 = vmatpush1.msra.mxu0 0.0
  %370 = vmatprep.subr.mxu0 0.0
  %371 = vmatpush1.msra.mxu0 0.0
  %372 = vmatprep.subr.mxu0 0.0
  %373 = vmatpush1.msra.mxu0 0.0
  %374 = vmatprep.subr.mxu0 0.0
  %375 = vmatpush1.msra.mxu0 0.0
  %376 = vmatprep.subr.mxu0 0.0
  %377 = vmatpush1.msra.mxu0 0.0
  %378 = vmatprep.subr.mxu0 0.0
  %379 = vmatpush1.msra.mxu0 0.0
  %380 = vmatprep.subr.mxu0 0.0
  %381 = vmatpush1.msra.mxu0 0.0
  %382 = vmatprep.subr.mxu0 0.0
  %383 = vmatpush1.msra.mxu0 0.0
  %384 = vmatprep.subr.mxu0 0.0
  %385 = vmatpush1.msra.mxu0 0.0
  %386 = vmatprep.subr.mxu0 0.0
  %387 = vmatpush1.msra.mxu0 0.0
  %388 = vmatprep.subr.mxu0 0.0
  %389 = vmatpush1.msra.mxu0 0.0
  %390 = vmatprep.subr.mxu0 0.0
  %391 = vmatpush1.msra.mxu0 0.0
  %392 = vmatprep.subr.mxu0 0.0
  %393 = vmatpush1.msra.mxu0 0.0
  %394 = vmatprep.mubr.f32.mxu0 0.0
  %v395 = vand.u32 %v21, 4294901760
  %396 = vmatmul.mubr.f32.gmra.mrb[0].mxu0 %v395
  %v397 = vpop.f32.mrb[0].mxu0
  %v398 = vadd.f32 %v324, %v397
  %v399 = vpop.f32.mrb[0].mxu0
  %400 = vdwg.mxu0
  %401 = vmatprep.subr.mxu0 0.0
  %v402 = vand.u32 %v25, 4294901760
  %403 = vmatpush1.msra.mxu0 %v402
  %404 = vmatprep.subr.mxu0 0.0
  %405 = vmatpush1.msra.mxu0 0.0
  %406 = vmatprep.subr.mxu0 0.0
  %407 = vmatpush1.msra.mxu0 0.0
  %408 = vmatprep.subr.mxu0 0.0
  %409 = vmatpush1.msra.mxu0 0.0
  %410 = vmatprep.subr.mxu0 0.0
  %411 = vmatpush1.msra.mxu0 0.0
  %412 = vmatprep.subr.mxu0 0.0
  %413 = vmatpush1.msra.mxu0 0.0
  %414 = vmatprep.subr.mxu0 0.0
  %415 = vmatpush1.msra.mxu0 0.0
  %416 = vmatprep.subr.mxu0 0.0
  %417 = vmatpush1.msra.mxu0 0.0
  %418 = vmatprep.subr.mxu0 0.0
  %419 = vmatpush1.msra.mxu0 0.0
  %420 = vmatprep.subr.mxu0 0.0
  %421 = vmatpush1.msra.mxu0 0.0
  %422 = vmatprep.subr.mxu0 0.0
  %423 = vmatpush1.msra.mxu0 0.0
  %424 = vmatprep.subr.mxu0 0.0
  %425 = vmatpush1.msra.mxu0 0.0
  %426 = vmatprep.subr.mxu0 0.0
  %427 = vmatpush1.msra.mxu0 0.0
  %428 = vmatprep.subr.mxu0 0.0
  %429 = vmatpush1.msra.mxu0 0.0
  %430 = vmatprep.subr.mxu0 0.0
  %431 = vmatpush1.msra.mxu0 0.0
  %432 = vmatprep.subr.mxu0 0.0
  %433 = vmatpush1.msra.mxu0 0.0
  %434 = vmatprep.subr.mxu0 0.0
  %435 = vmatpush1.msra.mxu0 0.0
  %436 = vmatprep.subr.mxu0 0.0
  %437 = vmatpush1.msra.mxu0 0.0
  %438 = vmatprep.subr.mxu0 0.0
  %439 = vmatpush1.msra.mxu0 0.0
  %440 = vmatprep.subr.mxu0 0.0
  %441 = vmatpush1.msra.mxu0 0.0
  %442 = vmatprep.subr.mxu0 0.0
  %443 = vmatpush1.msra.mxu0 0.0
  %444 = vmatprep.subr.mxu0 0.0
  %445 = vmatpush1.msra.mxu0 0.0
  %446 = vmatprep.subr.mxu0 0.0
  %447 = vmatpush1.msra.mxu0 0.0
  %448 = vmatprep.subr.mxu0 0.0
  %449 = vmatpush1.msra.mxu0 0.0
  %450 = vmatprep.subr.mxu0 0.0
  %451 = vmatpush1.msra.mxu0 0.0
  %452 = vmatprep.subr.mxu0 0.0
  %453 = vmatpush1.msra.mxu0 0.0
  %454 = vmatprep.subr.mxu0 0.0
  %455 = vmatpush1.msra.mxu0 0.0
  %456 = vmatprep.subr.mxu0 0.0
  %457 = vmatpush1.msra.mxu0 0.0
  %458 = vmatprep.subr.mxu0 0.0
  %459 = vmatpush1.msra.mxu0 0.0
  %460 = vmatprep.subr.mxu0 0.0
  %461 = vmatpush1.msra.mxu0 0.0
  %462 = vmatprep.subr.mxu0 0.0
  %463 = vmatpush1.msra.mxu0 0.0
  %464 = vmatprep.subr.mxu0 0.0
  %465 = vmatpush1.msra.mxu0 0.0
  %466 = vmatprep.mubr.f32.mxu0 0.0
  %v467 = vand.u32 %v21, 4294901760
  %468 = vmatmul.mubr.f32.gmra.mrb[0].mxu0 %v467
  %v469 = vpop.f32.mrb[0].mxu0
  %v470 = vadd.f32 %v398, %v469
  %v471 = vpop.f32.mrb[0].mxu0
  %472 = vdwg.mxu0
  %v473 = vld [vmem:[%s2] sm:$0xff]
  %v474 = vld [vmem:[%s3] sm:$0x1]
  %v476 = vlaneseq
  %v477 = vshrl.u32 %v476, 7
  %v478 = vsub.s32 0, %v477
  %v479 = vrot.slane %v474, %v478
  %vm481 = vcmask 64512
  %v483 = vsel %vm481, %v470, 0
  %485 = vmatprep.subr.mxu0 0.0
  %v486 = vand.u32 %v473, 4294901760
  %487 = vmatpush1.msra.mxu0 %v486
  %488 = vmatprep.subr.mxu0 0.0
  %489 = vmatpush1.msra.mxu0 0.0
  %490 = vmatprep.subr.mxu0 0.0
  %491 = vmatpush1.msra.mxu0 0.0
  %492 = vmatprep.subr.mxu0 0.0
  %493 = vmatpush1.msra.mxu0 0.0
  %494 = vmatprep.subr.mxu0 0.0
  %495 = vmatpush1.msra.mxu0 0.0
  %496 = vmatprep.subr.mxu0 0.0
  %497 = vmatpush1.msra.mxu0 0.0
  %498 = vmatprep.subr.mxu0 0.0
  %499 = vmatpush1.msra.mxu0 0.0
  %500 = vmatprep.subr.mxu0 0.0
  %501 = vmatpush1.msra.mxu0 0.0
  %502 = vmatprep.subr.mxu0 0.0
  %503 = vmatpush1.msra.mxu0 0.0
  %504 = vmatprep.subr.mxu0 0.0
  %505 = vmatpush1.msra.mxu0 0.0
  %506 = vmatprep.subr.mxu0 0.0
  %507 = vmatpush1.msra.mxu0 0.0
  %508 = vmatprep.subr.mxu0 0.0
  %509 = vmatpush1.msra.mxu0 0.0
  %510 = vmatprep.subr.mxu0 0.0
  %511 = vmatpush1.msra.mxu0 0.0
  %512 = vmatprep.subr.mxu0 0.0
  %513 = vmatpush1.msra.mxu0 0.0
  %514 = vmatprep.subr.mxu0 0.0
  %515 = vmatpush1.msra.mxu0 0.0
  %516 = vmatprep.subr.mxu0 0.0
  %517 = vmatpush1.msra.mxu0 0.0
  %518 = vmatprep.subr.mxu0 0.0
  %519 = vmatpush1.msra.mxu0 0.0
  %520 = vmatprep.subr.mxu0 0.0
  %521 = vmatpush1.msra.mxu0 0.0
  %522 = vmatprep.subr.mxu0 0.0
  %523 = vmatpush1.msra.mxu0 0.0
  %524 = vmatprep.subr.mxu0 0.0
  %525 = vmatpush1.msra.mxu0 0.0
  %526 = vmatprep.subr.mxu0 0.0
  %527 = vmatpush1.msra.mxu0 0.0
  %528 = vmatprep.subr.mxu0 0.0
  %529 = vmatpush1.msra.mxu0 0.0
  %530 = vmatprep.subr.mxu0 0.0
  %531 = vmatpush1.msra.mxu0 0.0
  %532 = vmatprep.subr.mxu0 0.0
  %533 = vmatpush1.msra.mxu0 0.0
  %534 = vmatprep.subr.mxu0 0.0
  %535 = vmatpush1.msra.mxu0 0.0
  %536 = vmatprep.subr.mxu0 0.0
  %537 = vmatpush1.msra.mxu0 0.0
  %538 = vmatprep.subr.mxu0 0.0
  %539 = vmatpush1.msra.mxu0 0.0
  %540 = vmatprep.subr.mxu0 0.0
  %541 = vmatpush1.msra.mxu0 0.0
  %542 = vmatprep.subr.mxu0 0.0
  %543 = vmatpush1.msra.mxu0 0.0
  %544 = vmatprep.subr.mxu0 0.0
  %545 = vmatpush1.msra.mxu0 0.0
  %546 = vmatprep.subr.mxu0 0.0
  %547 = vmatpush1.msra.mxu0 0.0
  %548 = vmatprep.subr.mxu0 0.0
  %549 = vmatpush1.msra.mxu0 0.0
  %550 = vmatprep.mubr.f32.mxu0 0.0
  %v551 = vand.u32 %v483, 4294901760
  %v552 = vsub.f32 %v483, %v551
  %v553 = vand.u32 %v552, 4294901760
  %v554 = vsub.f32 %v552, %v553
  %v555 = vand.u32 %v554, 4294901760
  %556 = vmatmul.mubr.f32.gmra.mrb[0].mxu0 %v555
  %v557 = vpop.f32.mrb[0].mxu0
  %v558 = vadd.f32 %v479, %v557
  %v559 = vpop.f32.mrb[0].mxu0
  %560 = vdwg.mxu0
  %561 = vmatprep.subr.mxu0 0.0
  %v562 = vand.u32 %v473, 4294901760
  %v563 = vsub.f32 %v473, %v562
  %v564 = vand.u32 %v563, 4294901760
  %v565 = vsub.f32 %v563, %v564
  %v566 = vand.u32 %v565, 4294901760
  %567 = vmatpush1.msra.mxu0 %v566
  %568 = vmatprep.subr.mxu0 0.0
  %569 = vmatpush1.msra.mxu0 0.0
  %570 = vmatprep.subr.mxu0 0.0
  %571 = vmatpush1.msra.mxu0 0.0
  %572 = vmatprep.subr.mxu0 0.0
  %573 = vmatpush1.msra.mxu0 0.0
  %574 = vmatprep.subr.mxu0 0.0
  %575 = vmatpush1.msra.mxu0 0.0
  %576 = vmatprep.subr.mxu0 0.0
  %577 = vmatpush1.msra.mxu0 0.0
  %578 = vmatprep.subr.mxu0 0.0
  %579 = vmatpush1.msra.mxu0 0.0
  %580 = vmatprep.subr.mxu0 0.0
  %581 = vmatpush1.msra.mxu0 0.0
  %582 = vmatprep.subr.mxu0 0.0
  %583 = vmatpush1.msra.mxu0 0.0
  %584 = vmatprep.subr.mxu0 0.0
  %585 = vmatpush1.msra.mxu0 0.0
  %586 = vmatprep.subr.mxu0 0.0
  %587 = vmatpush1.msra.mxu0 0.0
  %588 = vmatprep.subr.mxu0 0.0
  %589 = vmatpush1.msra.mxu0 0.0
  %590 = vmatprep.subr.mxu0 0.0
  %591 = vmatpush1.msra.mxu0 0.0
  %592 = vmatprep.subr.mxu0 0.0
  %593 = vmatpush1.msra.mxu0 0.0
  %594 = vmatprep.subr.mxu0 0.0
  %595 = vmatpush1.msra.mxu0 0.0
  %596 = vmatprep.subr.mxu0 0.0
  %597 = vmatpush1.msra.mxu0 0.0
  %598 = vmatprep.subr.mxu0 0.0
  %599 = vmatpush1.msra.mxu0 0.0
  %600 = vmatprep.subr.mxu0 0.0
  %601 = vmatpush1.msra.mxu0 0.0
  %602 = vmatprep.subr.mxu0 0.0
  %603 = vmatpush1.msra.mxu0 0.0
  %604 = vmatprep.subr.mxu0 0.0
  %605 = vmatpush1.msra.mxu0 0.0
  %606 = vmatprep.subr.mxu0 0.0
  %607 = vmatpush1.msra.mxu0 0.0
  %608 = vmatprep.subr.mxu0 0.0
  %609 = vmatpush1.msra.mxu0 0.0
  %610 = vmatprep.subr.mxu0 0.0
  %611 = vmatpush1.msra.mxu0 0.0
  %612 = vmatprep.subr.mxu0 0.0
  %613 = vmatpush1.msra.mxu0 0.0
  %614 = vmatprep.subr.mxu0 0.0
  %615 = vmatpush1.msra.mxu0 0.0
  %616 = vmatprep.subr.mxu0 0.0
  %617 = vmatpush1.msra.mxu0 0.0
  %618 = vmatprep.subr.mxu0 0.0
  %619 = vmatpush1.msra.mxu0 0.0
  %620 = vmatprep.subr.mxu0 0.0
  %621 = vmatpush1.msra.mxu0 0.0
  %622 = vmatprep.subr.mxu0 0.0
  %623 = vmatpush1.msra.mxu0 0.0
  %624 = vmatprep.subr.mxu0 0.0
  %625 = vmatpush1.msra.mxu0 0.0
  %626 = vmatprep.subr.mxu0 0.0
  %627 = vmatpush1.msra.mxu0 0.0
  %628 = vmatprep.subr.mxu0 0.0
  %629 = vmatpush1.msra.mxu0 0.0
  %630 = vmatprep.mubr.f32.mxu0 0.0
  %v631 = vand.u32 %v483, 4294901760
  %632 = vmatmul.mubr.f32.gmra.mrb[0].mxu0 %v631
  %v633 = vpop.f32.mrb[0].mxu0
  %v634 = vadd.f32 %v558, %v633
  %v635 = vpop.f32.mrb[0].mxu0
  %636 = vdwg.mxu0
  %637 = vmatprep.subr.mxu0 0.0
  %v638 = vand.u32 %v473, 4294901760
  %v639 = vsub.f32 %v473, %v638
  %640 = vmatpush1.msra.mxu0 %v639
  %641 = vmatprep.subr.mxu0 0.0
  %642 = vmatpush1.msra.mxu0 0.0
  %643 = vmatprep.subr.mxu0 0.0
  %644 = vmatpush1.msra.mxu0 0.0
  %645 = vmatprep.subr.mxu0 0.0
  %646 = vmatpush1.msra.mxu0 0.0
  %647 = vmatprep.subr.mxu0 0.0
  %648 = vmatpush1.msra.mxu0 0.0
  %649 = vmatprep.subr.mxu0 0.0
  %650 = vmatpush1.msra.mxu0 0.0
  %651 = vmatprep.subr.mxu0 0.0
  %652 = vmatpush1.msra.mxu0 0.0
  %653 = vmatprep.subr.mxu0 0.0
  %654 = vmatpush1.msra.mxu0 0.0
  %655 = vmatprep.subr.mxu0 0.0
  %656 = vmatpush1.msra.mxu0 0.0
  %657 = vmatprep.subr.mxu0 0.0
  %658 = vmatpush1.msra.mxu0 0.0
  %659 = vmatprep.subr.mxu0 0.0
  %660 = vmatpush1.msra.mxu0 0.0
  %661 = vmatprep.subr.mxu0 0.0
  %662 = vmatpush1.msra.mxu0 0.0
  %663 = vmatprep.subr.mxu0 0.0
  %664 = vmatpush1.msra.mxu0 0.0
  %665 = vmatprep.subr.mxu0 0.0
  %666 = vmatpush1.msra.mxu0 0.0
  %667 = vmatprep.subr.mxu0 0.0
  %668 = vmatpush1.msra.mxu0 0.0
  %669 = vmatprep.subr.mxu0 0.0
  %670 = vmatpush1.msra.mxu0 0.0
  %671 = vmatprep.subr.mxu0 0.0
  %672 = vmatpush1.msra.mxu0 0.0
  %673 = vmatprep.subr.mxu0 0.0
  %674 = vmatpush1.msra.mxu0 0.0
  %675 = vmatprep.subr.mxu0 0.0
  %676 = vmatpush1.msra.mxu0 0.0
  %677 = vmatprep.subr.mxu0 0.0
  %678 = vmatpush1.msra.mxu0 0.0
  %679 = vmatprep.subr.mxu0 0.0
  %680 = vmatpush1.msra.mxu0 0.0
  %681 = vmatprep.subr.mxu0 0.0
  %682 = vmatpush1.msra.mxu0 0.0
  %683 = vmatprep.subr.mxu0 0.0
  %684 = vmatpush1.msra.mxu0 0.0
  %685 = vmatprep.subr.mxu0 0.0
  %686 = vmatpush1.msra.mxu0 0.0
  %687 = vmatprep.subr.mxu0 0.0
  %688 = vmatpush1.msra.mxu0 0.0
  %689 = vmatprep.subr.mxu0 0.0
  %690 = vmatpush1.msra.mxu0 0.0
  %691 = vmatprep.subr.mxu0 0.0
  %692 = vmatpush1.msra.mxu0 0.0
  %693 = vmatprep.subr.mxu0 0.0
  %694 = vmatpush1.msra.mxu0 0.0
  %695 = vmatprep.subr.mxu0 0.0
  %696 = vmatpush1.msra.mxu0 0.0
  %697 = vmatprep.subr.mxu0 0.0
  %698 = vmatpush1.msra.mxu0 0.0
  %699 = vmatprep.subr.mxu0 0.0
  %700 = vmatpush1.msra.mxu0 0.0
  %701 = vmatprep.subr.mxu0 0.0
  %702 = vmatpush1.msra.mxu0 0.0
  %703 = vmatprep.mubr.f32.mxu0 0.0
  %v704 = vand.u32 %v483, 4294901760
  %v705 = vsub.f32 %v483, %v704
  %706 = vmatmul.mubr.f32.gmra.mrb[0].mxu0 %v705
  %v707 = vpop.f32.mrb[0].mxu0
  %v708 = vadd.f32 %v634, %v707
  %v709 = vpop.f32.mrb[0].mxu0
  %710 = vdwg.mxu0
  %711 = vmatprep.subr.mxu0 0.0
  %v712 = vand.u32 %v473, 4294901760
  %713 = vmatpush1.msra.mxu0 %v712
  %714 = vmatprep.subr.mxu0 0.0
  %715 = vmatpush1.msra.mxu0 0.0
  %716 = vmatprep.subr.mxu0 0.0
  %717 = vmatpush1.msra.mxu0 0.0
  %718 = vmatprep.subr.mxu0 0.0
  %719 = vmatpush1.msra.mxu0 0.0
  %720 = vmatprep.subr.mxu0 0.0
  %721 = vmatpush1.msra.mxu0 0.0
  %722 = vmatprep.subr.mxu0 0.0
  %723 = vmatpush1.msra.mxu0 0.0
  %724 = vmatprep.subr.mxu0 0.0
  %725 = vmatpush1.msra.mxu0 0.0
  %726 = vmatprep.subr.mxu0 0.0
  %727 = vmatpush1.msra.mxu0 0.0
  %728 = vmatprep.subr.mxu0 0.0
  %729 = vmatpush1.msra.mxu0 0.0
  %730 = vmatprep.subr.mxu0 0.0
  %731 = vmatpush1.msra.mxu0 0.0
  %732 = vmatprep.subr.mxu0 0.0
  %733 = vmatpush1.msra.mxu0 0.0
  %734 = vmatprep.subr.mxu0 0.0
  %735 = vmatpush1.msra.mxu0 0.0
  %736 = vmatprep.subr.mxu0 0.0
  %737 = vmatpush1.msra.mxu0 0.0
  %738 = vmatprep.subr.mxu0 0.0
  %739 = vmatpush1.msra.mxu0 0.0
  %740 = vmatprep.subr.mxu0 0.0
  %741 = vmatpush1.msra.mxu0 0.0
  %742 = vmatprep.subr.mxu0 0.0
  %743 = vmatpush1.msra.mxu0 0.0
  %744 = vmatprep.subr.mxu0 0.0
  %745 = vmatpush1.msra.mxu0 0.0
  %746 = vmatprep.subr.mxu0 0.0
  %747 = vmatpush1.msra.mxu0 0.0
  %748 = vmatprep.subr.mxu0 0.0
  %749 = vmatpush1.msra.mxu0 0.0
  %750 = vmatprep.subr.mxu0 0.0
  %751 = vmatpush1.msra.mxu0 0.0
  %752 = vmatprep.subr.mxu0 0.0
  %753 = vmatpush1.msra.mxu0 0.0
  %754 = vmatprep.subr.mxu0 0.0
  %755 = vmatpush1.msra.mxu0 0.0
  %756 = vmatprep.subr.mxu0 0.0
  %757 = vmatpush1.msra.mxu0 0.0
  %758 = vmatprep.subr.mxu0 0.0
  %759 = vmatpush1.msra.mxu0 0.0
  %760 = vmatprep.subr.mxu0 0.0
  %761 = vmatpush1.msra.mxu0 0.0
  %762 = vmatprep.subr.mxu0 0.0
  %763 = vmatpush1.msra.mxu0 0.0
  %764 = vmatprep.subr.mxu0 0.0
  %765 = vmatpush1.msra.mxu0 0.0
  %766 = vmatprep.subr.mxu0 0.0
  %767 = vmatpush1.msra.mxu0 0.0
  %768 = vmatprep.subr.mxu0 0.0
  %769 = vmatpush1.msra.mxu0 0.0
  %770 = vmatprep.subr.mxu0 0.0
  %771 = vmatpush1.msra.mxu0 0.0
  %772 = vmatprep.subr.mxu0 0.0
  %773 = vmatpush1.msra.mxu0 0.0
  %774 = vmatprep.subr.mxu0 0.0
  %775 = vmatpush1.msra.mxu0 0.0
  %776 = vmatprep.mubr.f32.mxu0 0.0
  %v777 = vand.u32 %v483, 4294901760
  %v778 = vsub.f32 %v483, %v777
  %v779 = vand.u32 %v778, 4294901760
  %780 = vmatmul.mubr.f32.gmra.mrb[0].mxu0 %v779
  %v781 = vpop.f32.mrb[0].mxu0
  %v782 = vadd.f32 %v708, %v781
  %v783 = vpop.f32.mrb[0].mxu0
  %784 = vdwg.mxu0
  %785 = vmatprep.subr.mxu0 0.0
  %v786 = vand.u32 %v473, 4294901760
  %v787 = vsub.f32 %v473, %v786
  %v788 = vand.u32 %v787, 4294901760
  %789 = vmatpush1.msra.mxu0 %v788
  %790 = vmatprep.subr.mxu0 0.0
  %791 = vmatpush1.msra.mxu0 0.0
  %792 = vmatprep.subr.mxu0 0.0
  %793 = vmatpush1.msra.mxu0 0.0
  %794 = vmatprep.subr.mxu0 0.0
  %795 = vmatpush1.msra.mxu0 0.0
  %796 = vmatprep.subr.mxu0 0.0
  %797 = vmatpush1.msra.mxu0 0.0
  %798 = vmatprep.subr.mxu0 0.0
  %799 = vmatpush1.msra.mxu0 0.0
  %800 = vmatprep.subr.mxu0 0.0
  %801 = vmatpush1.msra.mxu0 0.0
  %802 = vmatprep.subr.mxu0 0.0
  %803 = vmatpush1.msra.mxu0 0.0
  %804 = vmatprep.subr.mxu0 0.0
  %805 = vmatpush1.msra.mxu0 0.0
  %806 = vmatprep.subr.mxu0 0.0
  %807 = vmatpush1.msra.mxu0 0.0
  %808 = vmatprep.subr.mxu0 0.0
  %809 = vmatpush1.msra.mxu0 0.0
  %810 = vmatprep.subr.mxu0 0.0
  %811 = vmatpush1.msra.mxu0 0.0
  %812 = vmatprep.subr.mxu0 0.0
  %813 = vmatpush1.msra.mxu0 0.0
  %814 = vmatprep.subr.mxu0 0.0
  %815 = vmatpush1.msra.mxu0 0.0
  %816 = vmatprep.subr.mxu0 0.0
  %817 = vmatpush1.msra.mxu0 0.0
  %818 = vmatprep.subr.mxu0 0.0
  %819 = vmatpush1.msra.mxu0 0.0
  %820 = vmatprep.subr.mxu0 0.0
  %821 = vmatpush1.msra.mxu0 0.0
  %822 = vmatprep.subr.mxu0 0.0
  %823 = vmatpush1.msra.mxu0 0.0
  %824 = vmatprep.subr.mxu0 0.0
  %825 = vmatpush1.msra.mxu0 0.0
  %826 = vmatprep.subr.mxu0 0.0
  %827 = vmatpush1.msra.mxu0 0.0
  %828 = vmatprep.subr.mxu0 0.0
  %829 = vmatpush1.msra.mxu0 0.0
  %830 = vmatprep.subr.mxu0 0.0
  %831 = vmatpush1.msra.mxu0 0.0
  %832 = vmatprep.subr.mxu0 0.0
  %833 = vmatpush1.msra.mxu0 0.0
  %834 = vmatprep.subr.mxu0 0.0
  %835 = vmatpush1.msra.mxu0 0.0
  %836 = vmatprep.subr.mxu0 0.0
  %837 = vmatpush1.msra.mxu0 0.0
  %838 = vmatprep.subr.mxu0 0.0
  %839 = vmatpush1.msra.mxu0 0.0
  %840 = vmatprep.subr.mxu0 0.0
  %841 = vmatpush1.msra.mxu0 0.0
  %842 = vmatprep.subr.mxu0 0.0
  %843 = vmatpush1.msra.mxu0 0.0
  %844 = vmatprep.subr.mxu0 0.0
  %845 = vmatpush1.msra.mxu0 0.0
  %846 = vmatprep.subr.mxu0 0.0
  %847 = vmatpush1.msra.mxu0 0.0
  %848 = vmatprep.subr.mxu0 0.0
  %849 = vmatpush1.msra.mxu0 0.0
  %850 = vmatprep.subr.mxu0 0.0
  %851 = vmatpush1.msra.mxu0 0.0
  %852 = vmatprep.mubr.f32.mxu0 0.0
  %v853 = vand.u32 %v483, 4294901760
  %854 = vmatmul.mubr.f32.gmra.mrb[0].mxu0 %v853
  %v855 = vpop.f32.mrb[0].mxu0
  %v856 = vadd.f32 %v782, %v855
  %v857 = vpop.f32.mrb[0].mxu0
  %858 = vdwg.mxu0
  %859 = vmatprep.subr.mxu0 0.0
  %v860 = vand.u32 %v473, 4294901760
  %861 = vmatpush1.msra.mxu0 %v860
  %862 = vmatprep.subr.mxu0 0.0
  %863 = vmatpush1.msra.mxu0 0.0
  %864 = vmatprep.subr.mxu0 0.0
  %865 = vmatpush1.msra.mxu0 0.0
  %866 = vmatprep.subr.mxu0 0.0
  %867 = vmatpush1.msra.mxu0 0.0
  %868 = vmatprep.subr.mxu0 0.0
  %869 = vmatpush1.msra.mxu0 0.0
  %870 = vmatprep.subr.mxu0 0.0
  %871 = vmatpush1.msra.mxu0 0.0
  %872 = vmatprep.subr.mxu0 0.0
  %873 = vmatpush1.msra.mxu0 0.0
  %874 = vmatprep.subr.mxu0 0.0
  %875 = vmatpush1.msra.mxu0 0.0
  %876 = vmatprep.subr.mxu0 0.0
  %877 = vmatpush1.msra.mxu0 0.0
  %878 = vmatprep.subr.mxu0 0.0
  %879 = vmatpush1.msra.mxu0 0.0
  %880 = vmatprep.subr.mxu0 0.0
  %881 = vmatpush1.msra.mxu0 0.0
  %882 = vmatprep.subr.mxu0 0.0
  %883 = vmatpush1.msra.mxu0 0.0
  %884 = vmatprep.subr.mxu0 0.0
  %885 = vmatpush1.msra.mxu0 0.0
  %886 = vmatprep.subr.mxu0 0.0
  %887 = vmatpush1.msra.mxu0 0.0
  %888 = vmatprep.subr.mxu0 0.0
  %889 = vmatpush1.msra.mxu0 0.0
  %890 = vmatprep.subr.mxu0 0.0
  %891 = vmatpush1.msra.mxu0 0.0
  %892 = vmatprep.subr.mxu0 0.0
  %893 = vmatpush1.msra.mxu0 0.0
  %894 = vmatprep.subr.mxu0 0.0
  %895 = vmatpush1.msra.mxu0 0.0
  %896 = vmatprep.subr.mxu0 0.0
  %897 = vmatpush1.msra.mxu0 0.0
  %898 = vmatprep.subr.mxu0 0.0
  %899 = vmatpush1.msra.mxu0 0.0
  %900 = vmatprep.subr.mxu0 0.0
  %901 = vmatpush1.msra.mxu0 0.0
  %902 = vmatprep.subr.mxu0 0.0
  %903 = vmatpush1.msra.mxu0 0.0
  %904 = vmatprep.subr.mxu0 0.0
  %905 = vmatpush1.msra.mxu0 0.0
  %906 = vmatprep.subr.mxu0 0.0
  %907 = vmatpush1.msra.mxu0 0.0
  %908 = vmatprep.subr.mxu0 0.0
  %909 = vmatpush1.msra.mxu0 0.0
  %910 = vmatprep.subr.mxu0 0.0
  %911 = vmatpush1.msra.mxu0 0.0
  %912 = vmatprep.subr.mxu0 0.0
  %913 = vmatpush1.msra.mxu0 0.0
  %914 = vmatprep.subr.mxu0 0.0
  %915 = vmatpush1.msra.mxu0 0.0
  %916 = vmatprep.subr.mxu0 0.0
  %917 = vmatpush1.msra.mxu0 0.0
  %918 = vmatprep.subr.mxu0 0.0
  %919 = vmatpush1.msra.mxu0 0.0
  %920 = vmatprep.subr.mxu0 0.0
  %921 = vmatpush1.msra.mxu0 0.0
  %922 = vmatprep.subr.mxu0 0.0
  %923 = vmatpush1.msra.mxu0 0.0
  %924 = vmatprep.mubr.f32.mxu0 0.0
  %v925 = vand.u32 %v483, 4294901760
  %926 = vmatmul.mubr.f32.gmra.mrb[0].mxu0 %v925
  %v927 = vpop.f32.mrb[0].mxu0
  %v928 = vadd.f32 %v856, %v927
  %v929 = vpop.f32.mrb[0].mxu0
  %930 = vdwg.mxu0
  %931 = vst.msk [vmem:[%s4] sm:$0xff] %vm19, %v928
  // Predicated region
  $region18: #{blob_model_forward.1} parent=0 // pred_check
    _
  $region19: #{blob_model_forward.1} parent=0 // pred_check_branch
    %933 = sbr.rel (0) target = $region21
  $region20: #{blob_model_forward.1} parent=0 // pred_region
    _
  $region21: #{blob_model_forward.1} parent=0 // pred_fallthru
    _
  // Predicated region
  $region22: #{blob_model_forward.1} parent=0 // pred_check
    _
  $region23: #{blob_model_forward.1} parent=0 // pred_check_branch
    %935 = sbr.rel (0) target = $region25
  $region24: #{blob_model_forward.1} parent=0 // pred_region
    _
  $region25: #{blob_model_forward.1} parent=0 // pred_fallthru
    _

</llo_original>
